<compile_context>
chip_gen: v7x
topology: tpu7x:2x2x1
jax: 0.10.0
libtpu: 0.0.40
codegen_flags: <defaults>
</compile_context>

<pallas_src>
import functools
import math

import jax
import jax.numpy as jnp
from jax import lax
from jax.experimental import pallas as pl
from jax.experimental.pallas import tpu as pltpu

LANES = 128


def _cdiv(a, b):
    return -(-a // b)


def _round_up(a, m):
    return _cdiv(a, m) * m


def _bce_terms_f32(x, xh):
    """x*log(xh) + (1-x)*log1p(-xh), logs clamped at -100 (torch BCE semantics)."""
    log_p = jnp.maximum(jnp.log(xh), -100.0)
    log_1mp = jnp.maximum(jnp.log1p(-xh), -100.0)
    # Rearranged to save a mul/add per element.
    return log_1mp + x * (log_p - log_1mp)


def _make_bce_kernel(rows, tile_rows, tiles_per_split, needs_mask, binary_targets):
    def kernel(x_ref, xhat_ref, out_ref, acc_ref):
        s = pl.program_id(0)   # split (parallel; per-TensorCore partial)
        t = pl.program_id(1)   # tile within split (arbitrary; streamed reduction)

        @pl.when(t == 0)
        def _init():
            acc_ref[s] = jnp.zeros((8, LANES), jnp.float32)

        x = x_ref[...].astype(jnp.float32)
        xh = xhat_ref[...].astype(jnp.float32)
        if binary_targets:
            # x in {0,1}: one EUP log per element instead of two.
            p = jnp.where(x >= 0.5, xh, 1.0 - xh)
            terms = jnp.maximum(jnp.log(p), -100.0)
        else:
            terms = _bce_terms_f32(x, xh)

        if needs_mask:
            # Ragged tail: zero rows past the real row count (partial/surplus
            # blocks bring in undefined data there). Pure VPU compare+select.
            lin = s * tiles_per_split + t
            valid = rows - lin * tile_rows
            row_ids = lax.broadcasted_iota(jnp.int32, terms.shape, 0)
            terms = jnp.where(row_ids < valid, terms, 0.0)

        # Fold (tile_rows, 128) -> (8, 128) with pure elementwise vreg adds.
        folded = terms.reshape(tile_rows // 8, 8, LANES).sum(axis=0)
        acc_ref[s] = acc_ref[s] + folded

        @pl.when(t == pl.num_programs(1) - 1)
        def _finalize():
            # Single cross-lane/sublane reduce per split.
            out_ref[0, 0] = -jnp.sum(acc_ref[s])

    return kernel


def _bce_sum_pallas(x2d, xh2d, *, rows, max_tile_rows, binary_targets):
    """Sum of -BCE terms over a (rows, 128) slab via a streamed Pallas reduction."""
    max_tile_rows = _round_up(max(int(max_tile_rows), 16), 16)

    # Two per-core partial sums when there is more than one tile of work
    # (feeds both TensorCores on v7x; harmless on single-TC v5e/v6e).
    tile_probe = min(max_tile_rows, _round_up(rows, 16))
    num_splits = 2 if _cdiv(rows, tile_probe) >= 2 else 1

    # Adaptive tile_rows: coverage exceeds `rows` by less than one tile.
    blocks_per_split = max(1, _cdiv(rows, num_splits * max_tile_rows))
    tile_rows = min(max_tile_rows,
                    _round_up(_cdiv(rows, num_splits * blocks_per_split), 16))
    num_blocks = _cdiv(rows, tile_rows)
    tiles_per_split = _cdiv(num_blocks, num_splits)
    needs_mask = num_splits * tiles_per_split * tile_rows != rows

    def img_index(s, t):
        lin = s * tiles_per_split + t
        # Clamp so a (rare) surplus block stays in bounds; it is fully masked.
        return (jnp.minimum(lin, num_blocks - 1), 0)

    img_spec = pl.BlockSpec((tile_rows, LANES), img_index)

    grid_spec = pltpu.PrefetchScalarGridSpec(
        num_scalar_prefetch=0,
        grid=(num_splits, tiles_per_split),
        in_specs=[img_spec, img_spec],
        out_specs=pl.BlockSpec((1, 1), lambda s, t: (s, 0),
                               memory_space=pltpu.MemorySpace.SMEM),
        scratch_shapes=[pltpu.VMEM((num_splits, 8, LANES), jnp.float32)],
    )

    tile_bytes = tile_rows * LANES * x2d.dtype.itemsize
    compiler_params = pltpu.CompilerParams(
        # TODO(synk): on v7x, if plain "parallel" does not shard the split axis
        # across both TensorCores, switch that axis to pltpu.CORE_PARALLEL.
        dimension_semantics=("parallel", "arbitrary"),
        # 2 inputs x 2 pipeline buffers + slack; floor at 16 MiB (safe on
        # v5e/v6e/v7x, well under every chip's physical VMEM).
        vmem_limit_bytes=int(max(16 * 2**20, 4 * tile_bytes + 4 * 2**20)),
    )
    elems = rows * LANES
    cost = pl.CostEstimate(
        flops=6 * elems,
        transcendentals=(1 if binary_targets else 2) * elems,
        bytes_accessed=2 * elems * x2d.dtype.itemsize + num_splits * 4,
    )

    kernel = _make_bce_kernel(rows, tile_rows, tiles_per_split, needs_mask,
                              binary_targets)
    partials = pl.pallas_call(
        kernel,
        out_shape=jax.ShapeDtypeStruct((num_splits, 1), jnp.float32),
        grid_spec=grid_spec,
        compiler_params=compiler_params,
        cost_estimate=cost,
    )(x2d, xh2d)
    return jnp.sum(partials)


@functools.partial(jax.jit, static_argnames=("max_tile_rows", "binary_targets"))
def vae_loss(x, x_hat, mean, log_var, alpha=1.0, *, max_tile_rows=8192,
             binary_targets=False):
    """alpha * BCE_sum(x_hat, x) - 0.5 * sum(1 + log_var - mean^2 - exp(log_var))."""
    assert x.shape == x_hat.shape
    assert mean.shape == log_var.shape

    total = math.prod(x.shape)
    full = (total // LANES) * LANES
    rem = total - full
    rows = full // LANES

    xf = x.reshape(-1)
    xhf = x_hat.reshape(-1)

    # KLD (latents are tiny) and the alpha scale stay in XLA in the wrapper.
    lv = log_var.astype(jnp.float32)
    m = mean.astype(jnp.float32)
    kld = -0.5 * jnp.sum(1.0 + lv - m * m - jnp.exp(lv))

    bce = jnp.float32(0.0)
    if rem:
        # <128-element ragged remainder: tiny XLA reduction, no HBM pad copy.
        bce = bce - jnp.sum(_bce_terms_f32(xf[full:].astype(jnp.float32),
                                           xhf[full:].astype(jnp.float32)))
    if rows:
        if rem:
            x2d = xf[:full].reshape(rows, LANES)
            xh2d = xhf[:full].reshape(rows, LANES)
        else:
            x2d = xf.reshape(rows, LANES)      # pure reshape: zero-copy
            xh2d = xhf.reshape(rows, LANES)
        bce = bce + _bce_sum_pallas(x2d, xh2d, rows=rows,
                                    max_tile_rows=max_tile_rows,
                                    binary_targets=binary_targets)

    return jnp.asarray(alpha, jnp.float32) * bce + kld


def _vae_loss_ref(x, x_hat, mean, log_var, alpha=1.0):
    log_p = jnp.maximum(jnp.log(x_hat), -100.0)
    log_1mp = jnp.maximum(jnp.log1p(-x_hat), -100.0)
    bce = -jnp.sum(x * log_p + (1.0 - x) * log_1mp)
    kld = -0.5 * jnp.sum(1.0 + log_var - mean ** 2 - jnp.exp(log_var))
    return alpha * bce + kld


if __name__ == "__main__":
    key = jax.random.PRNGKey(0)
    k1, k2, k3, k4 = jax.random.split(key, 4)

    # Case 1: NCHW batch whose element count is a multiple of 128 (zero-copy path).
    B, C, H, W = 2, 4, 16, 16
    latent = 32
    x = jax.nn.sigmoid(jax.random.normal(k1, (B, C, H, W), dtype=jnp.float32))
    x_hat = jax.nn.sigmoid(jax.random.normal(k2, (B, C, H, W), dtype=jnp.float32))
    mean = jax.random.normal(k3, (B, latent), dtype=jnp.float32)
    log_var = jax.random.normal(k4, (B, latent), dtype=jnp.float32)

    loss = vae_loss(x, x_hat, mean, log_var, alpha=1.0)
    jax.block_until_ready(loss)
    ref = _vae_loss_ref(x, x_hat, mean, log_var, alpha=1.0)
    assert jnp.allclose(loss, ref, rtol=1e-4, atol=1e-2), (loss, ref)

    # Case 2: ragged size (not a multiple of 128), conv-shaped latents, tiny tile
    # -> exercises the 2-split grid, in-kernel tail mask and wrapper remainder.
    k5, k6, k7, k8 = jax.random.split(jax.random.PRNGKey(1), 4)
    xb = jax.nn.sigmoid(jax.random.normal(k5, (2, 3, 25, 25), dtype=jnp.float32))
    xhb = jax.nn.sigmoid(jax.random.normal(k6, (2, 3, 25, 25), dtype=jnp.float32))
    mb = jax.random.normal(k7, (2, 8, 2, 2), dtype=jnp.float32)
    lvb = jax.random.normal(k8, (2, 8, 2, 2), dtype=jnp.float32)

    loss2 = vae_loss(xb, xhb, mb, lvb, alpha=0.7, max_tile_rows=16)
    jax.block_until_ready(loss2)
    ref2 = _vae_loss_ref(xb, xhb, mb, lvb, alpha=0.7)
    assert jnp.allclose(loss2, ref2, rtol=1e-4, atol=1e-2), (loss2, ref2)

    # Case 3: binarized targets with the single-log fast path (v7x EUP relief).
    xbin = (jax.random.uniform(jax.random.PRNGKey(2), (B, C, H, W)) < 0.5)
    xbin = xbin.astype(jnp.float32)
    loss3 = vae_loss(xbin, x_hat, mean, log_var, alpha=1.0, binary_targets=True)
    jax.block_until_ready(loss3)
    ref3 = _vae_loss_ref(xbin, x_hat, mean, log_var, alpha=1.0)
    assert jnp.allclose(loss3, ref3, rtol=1e-4, atol=1e-2), (loss3, ref3)

    print("KERNEL_OK")
</pallas_src>

<mosaic_0001>
module attributes {stable_mosaic.version = 11 : i64} {
  func.func @kernel(%arg0: i32, %arg1: i32, %arg2: memref<16x128xf32, #tpu.memory_space<vmem>>, %arg3: memref<16x128xf32, #tpu.memory_space<vmem>>, %arg4: memref<1x1xf32, #tpu.memory_space<smem>>, %arg5: memref<1x8x128xf32, #tpu.memory_space<vmem>>) attributes {dimension_semantics = [#tpu.dimension_semantics<parallel>, #tpu.dimension_semantics<arbitrary>], iteration_bounds = array<i64: 1, 1>, scalar_prefetch = 0 : i64, scratch_operands = 1 : i64, tpu.core_type = #tpu.core_type<tc>, window_params = [{transform_indices = @transform_0, window_bounds = array<i64: 16, 128>}, {transform_indices = @transform_1, window_bounds = array<i64: 16, 128>}, {transform_indices = @transform_2, window_bounds = array<i64: 1, 1>}]} {
    %c0_i32 = arith.constant 0 : i32
    %0 = arith.cmpi eq, %arg1, %c0_i32 : i32
    %1 = arith.extui %0 : i1 to i32
    %c0_i32_0 = arith.constant 0 : i32
    %2 = arith.cmpi ne, %1, %c0_i32_0 : i32
    scf.if %2 {
      %cst_13 = arith.constant 0.000000e+00 : f32
      %29 = vector.broadcast %cst_13 : f32 to vector<8x128xf32>
      %30 = arith.index_cast %arg0 : i32 to index
      %c0_14 = arith.constant 0 : index
      %c0_15 = arith.constant 0 : index
      %31 = vector.load %arg5[%30, %c0_14, %c0_15] : memref<1x8x128xf32, #tpu.memory_space<vmem>>, vector<1x8x128xf32>
      %32 = vector.shape_cast %31 : vector<1x8x128xf32> to vector<8x128xf32>
      %33 = vector.shape_cast %29 : vector<8x128xf32> to vector<1x8x128xf32>
      tpu.vector_store %arg5[%30, %c0_14, %c0_15], %33 {strides = array<i32>} : memref<1x8x128xf32, #tpu.memory_space<vmem>>, vector<1x8x128xf32>,
    } else {
    }
    %c0 = arith.constant 0 : index
    %c0_1 = arith.constant 0 : index
    %3 = vector.load %arg2[%c0, %c0_1] : memref<16x128xf32, #tpu.memory_space<vmem>>, vector<16x128xf32>
    %c0_2 = arith.constant 0 : index
    %c0_3 = arith.constant 0 : index
    %4 = vector.load %arg3[%c0_2, %c0_3] : memref<16x128xf32, #tpu.memory_space<vmem>>, vector<16x128xf32>
    %5 = math.log %4 : vector<16x128xf32>
    %cst = arith.constant -1.000000e+02 : f32
    %6 = vector.broadcast %cst : f32 to vector<16x128xf32>
    %7 = arith.maximumf %5, %6 : vector<16x128xf32>
    %cst_4 = arith.constant 0.000000e+00 : f32
    %8 = vector.broadcast %cst_4 : f32 to vector<16x128xf32>
    %9 = arith.subf %8, %4 : vector<16x128xf32>
    %10 = math.log1p %9 : vector<16x128xf32>
    %cst_5 = arith.constant -1.000000e+02 : f32
    %11 = vector.broadcast %cst_5 : f32 to vector<16x128xf32>
    %12 = arith.maximumf %10, %11 : vector<16x128xf32>
    %13 = arith.subf %7, %12 : vector<16x128xf32>
    %14 = arith.mulf %3, %13 : vector<16x128xf32>
    %15 = arith.addf %12, %14 : vector<16x128xf32>
    %16 = vector.shape_cast %15 : vector<16x128xf32> to vector<2x8x128xf32>
    %cst_6 = arith.constant dense<0.000000e+00> : vector<8x128xf32>
    %17 = vector.multi_reduction <add>, %16, %cst_6 [0] : vector<2x8x128xf32> to vector<8x128xf32>
    %18 = arith.index_cast %arg0 : i32 to index
    %c0_7 = arith.constant 0 : index
    %c0_8 = arith.constant 0 : index
    %19 = vector.load %arg5[%18, %c0_7, %c0_8] : memref<1x8x128xf32, #tpu.memory_space<vmem>>, vector<1x8x128xf32>
    %20 = vector.shape_cast %19 : vector<1x8x128xf32> to vector<8x128xf32>
    %21 = arith.addf %20, %17 : vector<8x128xf32>
    %22 = arith.index_cast %arg0 : i32 to index
    %c0_9 = arith.constant 0 : index
    %c0_10 = arith.constant 0 : index
    %23 = vector.load %arg5[%22, %c0_9, %c0_10] : memref<1x8x128xf32, #tpu.memory_space<vmem>>, vector<1x8x128xf32>
    %24 = vector.shape_cast %23 : vector<1x8x128xf32> to vector<8x128xf32>
    %25 = vector.shape_cast %21 : vector<8x128xf32> to vector<1x8x128xf32>
    tpu.vector_store %arg5[%22, %c0_9, %c0_10], %25 {strides = array<i32>} : memref<1x8x128xf32, #tpu.memory_space<vmem>>, vector<1x8x128xf32>,
    %c0_i32_11 = arith.constant 0 : i32
    %26 = arith.cmpi eq, %arg1, %c0_i32_11 : i32
    %27 = arith.extui %26 : i1 to i32
    %c0_i32_12 = arith.constant 0 : i32
    %28 = arith.cmpi ne, %27, %c0_i32_12 : i32
    scf.if %28 {
      %29 = arith.index_cast %arg0 : i32 to index
      %c0_13 = arith.constant 0 : index
      %c0_14 = arith.constant 0 : index
      %30 = vector.load %arg5[%29, %c0_13, %c0_14] : memref<1x8x128xf32, #tpu.memory_space<vmem>>, vector<1x8x128xf32>
      %31 = vector.shape_cast %30 : vector<1x8x128xf32> to vector<8x128xf32>
      %32 = vector.shape_cast %31 : vector<8x128xf32> to vector<1x8x128xf32>
      %cst_15 = arith.constant dense<0.000000e+00> : vector<1xf32>
      %33 = vector.multi_reduction <add>, %32, %cst_15 [1, 2] : vector<1x8x128xf32> to vector<1xf32>
      %34 = vector.shape_cast %33 : vector<1xf32> to vector<1x1x1xf32>
      %35 = vector.extract %34[0, 0, 0] : f32 from vector<1x1x1xf32>
      %cst_16 = arith.constant 0.000000e+00 : f32
      %36 = arith.subf %cst_16, %35 : f32
      %c0_17 = arith.constant 0 : index
      %c0_18 = arith.constant 0 : index
      %37 = memref.load %arg4[%c0_17, %c0_18] : memref<1x1xf32, #tpu.memory_space<smem>>
      memref.store %36, %arg4[%c0_17, %c0_18] : memref<1x1xf32, #tpu.memory_space<smem>>
    } else {
    }
    return
  }
  func.func @transform_0(%arg0: i32, %arg1: i32) -> (i32, i32) {
    %c1_i32 = arith.constant 1 : i32
    %0 = arith.muli %arg0, %c1_i32 : i32
    %1 = arith.addi %0, %arg1 : i32
    %c0_i32 = arith.constant 0 : i32
    %2 = arith.minsi %1, %c0_i32 : i32
    %c0_i32_0 = arith.constant 0 : i32
    %c0_i32_1 = arith.constant 0 : i32
    return %2, %c0_i32_0 : i32, i32
  }
  func.func @transform_1(%arg0: i32, %arg1: i32) -> (i32, i32) {
    %c1_i32 = arith.constant 1 : i32
    %0 = arith.muli %arg0, %c1_i32 : i32
    %1 = arith.addi %0, %arg1 : i32
    %c0_i32 = arith.constant 0 : i32
    %2 = arith.minsi %1, %c0_i32 : i32
    %c0_i32_0 = arith.constant 0 : i32
    %c0_i32_1 = arith.constant 0 : i32
    return %2, %c0_i32_0 : i32, i32
  }
  func.func @transform_2(%arg0: i32, %arg1: i32) -> (i32, i32) {
    %c0_i32 = arith.constant 0 : i32
    %c0_i32_0 = arith.constant 0 : i32
    return %arg0, %c0_i32 : i32, i32
  }
}

</mosaic_0001>

<llo_original>
// kernel: vae_loss.1
$region0: #{vae_loss.1}
  #allocation0 [shape = 'u32[]', space=smem, size = 0x4, offset = 0x4, fixed_abs, tag = 'smem constant byte address 0x4 - core index']
  #allocation1 [shape = 'u32[144,128]{1,0:T(1,128)}', space=vmem, size = 0x12000, scoped, tag = 'internal scratch']
  #allocation2 [shape = 'f32[1,8,128]{2,1,0:T(8,128)}', space=vmem, size = 0x1000, scoped, tag = 'scratch operand']
  %s0 = inlined_call_operand.vmem [shape: f32[16,128], index: 0, kind: input, shape index: {}]
  %s1 = inlined_call_operand.vmem [shape: f32[16,128], index: 1, kind: input, shape index: {}]
  %s2 = inlined_call_operand.hbm [shape: f32[1,1], index: 2, kind: output, shape index: {}]
  %s3 = sld [smem:[#allocation0]]
  $region26: #{vae_loss.1} parent=0
    _
  %s5 = ssub.s32 1, %s3
  %s6 = scalar_select 0, %s5, %s3
  $region1: #{vae_loss.1} parent=0
    #allocation3 [shape = 'u8[512]{0}', space=smem, size = 0x200, scoped, tag = 'output window, operand 0, single buffered']
    #allocation4 [shape = 's32[1]{0}', space=sflag, size = 0x4, scoped, tag = 'scoped memory for vae_loss.1']
    %7 = vsyncpa [#allocation4], 0
    // Predicated region
    $region2: #{vae_loss.1} parent=1 // pred_check
      _
    $region3: #{vae_loss.1} parent=1 // pred_check_branch
      %9 = sbr.rel (0) target = $region5
    $region4: #{vae_loss.1} parent=1 // pred_region
      %s10 = sadd.s32 0, 0
      %p11 = scmp.lt.s32.totalorder %s10, 0
      %s12 = scalar_select %p11, %s10, 0
      %s13 = smul.u32 2, %s12
      %p14 = scmp.lt.s32.totalorder %s13, 1
      %s15 = scalar_select %p14, %s13, 1
      %s16 = smul.addr %s15, 8
      %s17 = scalar_lea.vmem %s0, %s16
      %s18 = sadd.s32 0, 0
      %p19 = scmp.lt.s32.totalorder %s18, 0
      %s20 = scalar_select %p19, %s18, 0
      %s21 = smul.u32 2, %s20
    $region5: #{vae_loss.1} parent=1 // pred_fallthru
      _
    // Predicated region
    $region6: #{vae_loss.1} parent=1 // pred_check
      _
    $region7: #{vae_loss.1} parent=1 // pred_check_branch
      %23 = sbr.rel (0) target = $region9
    $region8: #{vae_loss.1} parent=1 // pred_region
      %s24 = sadd.s32 0, 0
      %p25 = scmp.lt.s32.totalorder %s24, 0
      %s26 = scalar_select %p25, %s24, 0
      %s27 = smul.u32 2, %s26
      %p28 = scmp.lt.s32.totalorder %s27, 1
      %s29 = scalar_select %p28, %s27, 1
      %s30 = smul.addr %s29, 8
      %s31 = scalar_lea.vmem %s1, %s30
      %s32 = sadd.s32 0, 0
      %p33 = scmp.lt.s32.totalorder %s32, 0
      %s34 = scalar_select %p33, %s32, 0
      %s35 = smul.u32 2, %s34
    $region9: #{vae_loss.1} parent=1 // pred_fallthru
      _
    %s36 = sadd.s32 0, 0
    %p37 = scmp.lt.s32.totalorder %s36, 0
    %s38 = scalar_select %p37, %s36, 0
    %s39 = smul.u32 2, %s38
    %p40 = scmp.lt.s32.totalorder %s39, 1
    %s41 = scalar_select %p40, %s39, 1
    %s42 = smul.addr %s41, 8
    %s43 = scalar_lea.vmem %s0, %s42
    %s44 = sadd.s32 0, 0
    %p45 = scmp.lt.s32.totalorder %s44, 0
    %s46 = scalar_select %p45, %s44, 0
    %s47 = smul.u32 2, %s46
    %p48 = scmp.lt.s32.totalorder %s47, 1
    %s49 = scalar_select %p48, %s47, 1
    %s50 = smul.addr %s49, 8
    %s51 = scalar_lea.vmem %s1, %s50
    %s52 = sadd.s32 0, 0
    %p53 = scmp.lt.s32.totalorder %s52, 0
    %s54 = scalar_select %p53, %s52, 0
    %s55 = smul.u32 2, %s54
    %p56 = scmp.lt.s32.totalorder %s55, 1
    %s57 = scalar_select %p56, %s55, 1
    %s58 = smul.addr %s57, 8
    %s59 = scalar_lea.vmem %s0, %s58
    %s60 = sadd.s32 0, 0
    %p61 = scmp.lt.s32.totalorder %s60, 0
    %s62 = scalar_select %p61, %s60, 0
    %s63 = smul.u32 2, %s62
    %s64 = sadd.s32 0, 0
    %p65 = scmp.lt.s32.totalorder %s64, 0
    %s66 = scalar_select %p65, %s64, 0
    %s67 = smul.u32 2, %s66
    %p68 = scmp.lt.s32.totalorder %s67, 1
    %s69 = scalar_select %p68, %s67, 1
    %s70 = smul.addr %s69, 8
    %s71 = scalar_lea.vmem %s1, %s70
    %s72 = sadd.s32 0, 0
    %p73 = scmp.lt.s32.totalorder %s72, 0
    %s74 = scalar_select %p73, %s72, 0
    %s75 = smul.u32 2, %s74
    %p76 = scmp.eq.s32.totalorder 0, 0
    // Predicated region
    $region10: #{vae_loss.1} parent=1 // pred_check
      %p77 = pneg %p76
    $region11: #{vae_loss.1} parent=1 // pred_check_branch
      %79 = sbr.rel (%p77) target = $region13
    $region12: #{vae_loss.1} parent=1 // pred_region
      %s80 = smul.u32 0, 8
      %s81 = scalar_lea.vmem [#allocation2], %s80
      %82 = vst [vmem:[%s81] sm:$0xff] 0.0
    $region13: #{vae_loss.1} parent=1 // pred_fallthru
      _
    %v83 = vld [vmem:[%s59] sm:$0xff]
    %v84 = vld [vmem:[%s59 + $0x8] sm:$0xff]
    %v85 = vld [vmem:[%s71] sm:$0xff]
    %v86 = vld [vmem:[%s71 + $0x8] sm:$0xff]
    %v87 = vlog2.pop %v85
    %v88 = vmul.f32 %v87, 0.6931472
    %v89 = vlog2.pop %v86
    %v90 = vmul.f32 %v89, 0.6931472
    %v91 = vmax.f32 %v88, -100.0
    %v92 = vmax.f32 %v90, -100.0
    %v93 = vsub.f32 0.0, %v85
    %v94 = vsub.f32 0.0, %v86
    %v95 = vadd.f32 %v93, 1.0
    %v96 = vlog2.pop %v95
    %v97 = vmul.f32 %v96, 0.6931472
    %v98 = vmul.f32 -0.5, %v93
    %v99 = vadd.f32 %v98, 1.0
    %v100 = vmul.f32 %v99, %v93
    %v101 = vand.u32 2147483647, %v93
    %vm102 = vcmp.lt.f32.partialorder %v101, 0.0004427343
    %v103 = vsel %vm102, %v100, %v97
    %v104 = vadd.f32 %v94, 1.0
    %v105 = vlog2.pop %v104
    %v106 = vmul.f32 %v105, 0.6931472
    %v107 = vmul.f32 -0.5, %v94
    %v108 = vadd.f32 %v107, 1.0
    %v109 = vmul.f32 %v108, %v94
    %v110 = vand.u32 2147483647, %v94
    %vm111 = vcmp.lt.f32.partialorder %v110, 0.0004427343
    %v112 = vsel %vm111, %v109, %v106
    %v113 = vmax.f32 %v103, -100.0
    %v114 = vmax.f32 %v112, -100.0
    %v115 = vsub.f32 %v91, %v113
    %v116 = vsub.f32 %v92, %v114
    %v117 = vmul.f32 %v83, %v115
    %v118 = vmul.f32 %v84, %v116
    %v119 = vadd.f32 %v113, %v117
    %v120 = vadd.f32 %v114, %v118
    %v121 = vadd.f32 %v119, %v120
    %s122 = smul.u32 0, 8
    %s123 = scalar_lea.vmem [#allocation2], %s122
    %v124 = vld [vmem:[%s123] sm:$0xff]
    %v125 = vadd.f32 %v124, %v121
    %126 = vst [vmem:[%s123] sm:$0xff] %v125
    // Predicated region
    $region14: #{vae_loss.1} parent=1 // pred_check
      %p127 = pneg %p76
    $region15: #{vae_loss.1} parent=1 // pred_check_branch
      %129 = sbr.rel (%p127) target = $region17
    $region16: #{vae_loss.1} parent=1 // pred_region
      %v130 = vld [vmem:[%s123] sm:$0xff]
      %131 = vadd.xlane.f32.xlu0 %v130
      %v132 = vpop.xlane.xlu0 %131
      %v133 = vrot.slane %v132, 4
      %v134 = vadd.f32 %v132, %v133
      %v135 = vrot.slane %v134, 2
      %v136 = vadd.f32 %v134, %v135
      %v137 = vrot.slane %v136, 1
      %v138 = vadd.f32 %v136, %v137
      %s139 = vtos %v138
      %s140 = ssub.f32 0.0, %s139
      %s141 = scalar_lea.smem [#allocation3], 0
      %142 = sst [smem:[%s141]] %s140
    $region17: #{vae_loss.1} parent=1 // pred_fallthru
      _
    // Predicated region
    $region18: #{vae_loss.1} parent=1 // pred_check
      _
    $region19: #{vae_loss.1} parent=1 // pred_check_branch
      %144 = sbr.rel (0) target = $region21
    $region20: #{vae_loss.1} parent=1 // pred_region
      %s146 = ssub.s32 16, 16
      %147 = vsyncadd [#allocation4], %s146
      %150 = dma.smem_to_hbm [#allocation3], 16, %s2, [#allocation4]
    $region21: #{vae_loss.1} parent=1 // pred_fallthru
      _
    // Predicated region
    $region22: #{vae_loss.1} parent=1 // pred_check
      _
    $region23: #{vae_loss.1} parent=1 // pred_check_branch
      %152 = sbr.rel (0) target = $region25
    $region24: #{vae_loss.1} parent=1 // pred_region
      %153 = dma.done [#allocation4], 16
    $region25: #{vae_loss.1} parent=1 // pred_fallthru
      _
    %154 = sfence
    %155 = vsyncpa [#allocation4], 1

</llo_original>
